<compile_context>
chip_gen: v7x
topology: tpu7x:2x2x1
jax: 0.10.0
libtpu: 0.0.40
codegen_flags: <defaults>
</compile_context>

<pallas_src>
import functools
import math

import jax
import jax.numpy as jnp
from jax import lax
from jax.experimental import pallas as pl
from jax.experimental.pallas import tpu as pltpu


def vit_emb_kernel(x_ref, w_ref, posg_ref, o_ref, *, groups, group_rows, emb_dim):
    # x_ref    : (tb*seq, Din)      zero cls row already inserted per batch
    # w_ref    : (Din, E)           resident weight (nn.Linear.weight transposed)
    # posg_ref : (G*seq, E)         [cls+pos0 ; pos[1:]+bias] tiled G times
    # o_ref    : (tb*seq, E)        one dense, sublane/lane-aligned store
    z = jnp.dot(x_ref[...], w_ref[...], preferred_element_type=jnp.float32)
    # group_rows = G*seq is a multiple of 8 => these reshapes keep the (8,128)
    # tiled layout intact (no relayout); the add is a broadcast VPU add.
    z = z.reshape(groups, group_rows, emb_dim) + posg_ref[...][None, :, :]
    o_ref[...] = z.reshape(groups * group_rows, emb_dim).astype(o_ref.dtype)


def _pick_tb(bn, tb_target):
    """Adaptive batch tile: multiple of 8, <= tb_target, even split, min padding."""
    bn8 = ((bn + 7) // 8) * 8
    n_blocks = max(1, -(-bn8 // tb_target))      # cdiv
    tb = -(-bn8 // n_blocks)                     # even split across blocks
    tb = ((tb + 7) // 8) * 8
    return tb, n_blocks


def vit_emb_layer(x, weight, bias, cls_token, pos_emb, *,
                  num_patch, input_dim, tb_target=256, out_dtype=None):
    """Pallas implementation of VitembLayer.forward.

    x         : (B, N, T, P) or (BN, num_patch, input_dim), float32
    weight    : (emb_dim, input_dim)   -- nn.Linear.weight layout
    bias      : (emb_dim,)
    cls_token : (1, 1, emb_dim)
    pos_emb   : (1, num_patch + 1, emb_dim)
    returns   : (BN, num_patch + 1, emb_dim)
    """
    if x.ndim == 4:
        x = x.reshape(-1, num_patch, input_dim)
    BN = x.shape[0]
    emb_dim = weight.shape[0]
    seq = num_patch + 1
    assert tb_target % 8 == 0, "tb_target must be a multiple of 8"
    if out_dtype is None:
        out_dtype = x.dtype

    tb, n_blocks = _pick_tb(BN, tb_target)
    bn_pad = tb * n_blocks

    # Single wrapper pass over x: insert the zero cls row per batch element and
    # absorb the batch padding in the same pad op.  This is what makes the
    # kernel's HBM-facing output a single dense unmasked store.
    # (Padded batch rows produce constant pos/bias rows; they are sliced off.)
    x_seq = jnp.pad(x, ((0, bn_pad - BN), (1, 0), (0, 0)))      # (bn_pad, seq, Din)
    x_flat = x_seq.reshape(bn_pad * seq, input_dim)

    # Batch-invariant constants hoisted out of the kernel.
    w_t = weight.T                                              # (Din, E)
    pos2d = pos_emb.reshape(seq, emb_dim)
    cls_row = cls_token.reshape(1, emb_dim) + pos2d[0:1, :]     # (1, E)
    patch_rows = pos2d[1:, :] + bias.reshape(1, emb_dim)        # (P, E)
    const = jnp.concatenate([cls_row, patch_rows], axis=0)      # (seq, E)

    # Tile the const table the minimal G times so G*seq is sublane (8) aligned;
    # independent of tb, so it stays tiny in HBM and VMEM.
    G = 8 // math.gcd(seq, 8)
    group_rows = G * seq
    assert tb % G == 0
    groups = tb // G
    posg = jnp.tile(const, (G, 1))                              # (G*seq, E)

    kernel = functools.partial(vit_emb_kernel, groups=groups,
                               group_rows=group_rows, emb_dim=emb_dim)

    out_flat = pl.pallas_call(
        kernel,
        out_shape=jax.ShapeDtypeStruct((bn_pad * seq, emb_dim), out_dtype),
        grid=(n_blocks,),
        in_specs=[
            pl.BlockSpec((tb * seq, input_dim), lambda i: (i, 0)),
            pl.BlockSpec((input_dim, emb_dim), lambda i: (0, 0)),
            pl.BlockSpec((group_rows, emb_dim), lambda i: (0, 0)),
        ],
        out_specs=pl.BlockSpec((tb * seq, emb_dim), lambda i: (i, 0)),
        compiler_params=pltpu.CompilerParams(
            dimension_semantics=("parallel",),      # megacore-shardable batch axis
            vmem_limit_bytes=32 * 1024 * 1024,      # ~5 MiB used at tb=256; safe on v5e/v6e/v7x
        ),
    )(x_flat, w_t, posg)

    out = out_flat.reshape(bn_pad, seq, emb_dim)[:BN]
    return out


if __name__ == "__main__":
    # Small shapes consistent with the module's forward:
    #   x (B, N, T, P) with T = num_patch, P = input_dim
    B, N = 2, 8
    num_patch = 8
    input_dim = 32
    emb_dim = 128
    seq = num_patch + 1

    key = jax.random.PRNGKey(0)
    kx, kw, kb, kc, kp = jax.random.split(key, 5)

    x = jax.random.normal(kx, (B, N, num_patch, input_dim), dtype=jnp.float32)
    # nn.Linear(input_dim, emb_dim): weight (emb_dim, input_dim), bias (emb_dim,)
    w = jax.random.normal(kw, (emb_dim, input_dim), dtype=jnp.float32) * 0.02
    bias = jax.random.normal(kb, (emb_dim,), dtype=jnp.float32) * 0.02
    cls_token = jax.random.normal(kc, (1, 1, emb_dim), dtype=jnp.float32)
    pos_emb = jax.random.normal(kp, (1, seq, emb_dim), dtype=jnp.float32)

    out = vit_emb_layer(x, w, bias, cls_token, pos_emb,
                        num_patch=num_patch, input_dim=input_dim)
    out = jax.block_until_ready(out)

    # Pure-JAX reference for sanity
    x_r = x.reshape(-1, num_patch, input_dim)
    z0 = jnp.einsum("bpd,ed->bpe", x_r, w,
                    precision=lax.Precision.HIGHEST) + bias
    cls_rep = jnp.broadcast_to(cls_token, (x_r.shape[0], 1, emb_dim))
    ref = jnp.concatenate([cls_rep, z0], axis=1) + pos_emb

    assert out.shape == (B * N, seq, emb_dim)
    max_err = float(jnp.max(jnp.abs(out - ref)))
    assert jnp.allclose(out, ref, atol=1e-5, rtol=1e-5), max_err
    print("KERNEL_OK")
</pallas_src>

<mosaic_0001>
module attributes {stable_mosaic.version = 11 : i64} {
  func.func @vit_emb_kernel(%arg0: i32, %arg1: memref<144x32xf32, #tpu.memory_space<vmem>>, %arg2: memref<32x128xf32, #tpu.memory_space<vmem>>, %arg3: memref<72x128xf32, #tpu.memory_space<vmem>>, %arg4: memref<144x128xf32, #tpu.memory_space<vmem>>) attributes {dimension_semantics = [#tpu.dimension_semantics<parallel>], iteration_bounds = array<i64: 1>, scalar_prefetch = 0 : i64, scratch_operands = 0 : i64, tpu.core_type = #tpu.core_type<tc>, window_params = [{transform_indices = @transform_0, window_bounds = array<i64: 144, 32>}, {pipeline_mode = #tpu.pipeline_mode<synchronous>, transform_indices = @transform_1, window_bounds = array<i64: 32, 128>}, {pipeline_mode = #tpu.pipeline_mode<synchronous>, transform_indices = @transform_2, window_bounds = array<i64: 72, 128>}, {transform_indices = @transform_3, window_bounds = array<i64: 144, 128>}]} {
    %c0 = arith.constant 0 : index
    %c0_0 = arith.constant 0 : index
    %0 = vector.load %arg1[%c0, %c0_0] : memref<144x32xf32, #tpu.memory_space<vmem>>, vector<144x32xf32>
    %c0_1 = arith.constant 0 : index
    %c0_2 = arith.constant 0 : index
    %1 = vector.load %arg2[%c0_1, %c0_2] : memref<32x128xf32, #tpu.memory_space<vmem>>, vector<32x128xf32>
    %cst = arith.constant dense<0.000000e+00> : vector<144x128xf32>
    %2 = tpu.matmul %0, %1, %cst {dimension_numbers = #tpu.dot_dimension_numbers<[1], [0], [0], [1], [0, 0, 1, 1], [], []>} : vector<144x32xf32>, vector<32x128xf32>, vector<144x128xf32> -> vector<144x128xf32>
    %3 = vector.shape_cast %2 : vector<144x128xf32> to vector<2x72x128xf32>
    %c0_3 = arith.constant 0 : index
    %c0_4 = arith.constant 0 : index
    %4 = vector.load %arg3[%c0_3, %c0_4] : memref<72x128xf32, #tpu.memory_space<vmem>>, vector<72x128xf32>
    %5 = vector.shape_cast %4 : vector<72x128xf32> to vector<1x72x128xf32>
    %6 = vector.broadcast %5 : vector<1x72x128xf32> to vector<2x72x128xf32>
    %7 = arith.addf %3, %6 : vector<2x72x128xf32>
    %8 = vector.shape_cast %7 : vector<2x72x128xf32> to vector<144x128xf32>
    %c0_5 = arith.constant 0 : index
    %c0_6 = arith.constant 0 : index
    %9 = vector.load %arg4[%c0_5, %c0_6] : memref<144x128xf32, #tpu.memory_space<vmem>>, vector<144x128xf32>
    tpu.vector_store %arg4[%c0_5, %c0_6], %8 {strides = array<i32>} : memref<144x128xf32, #tpu.memory_space<vmem>>, vector<144x128xf32>,
    return
  }
  func.func @transform_0(%arg0: i32) -> (i32, i32) {
    %c0_i32 = arith.constant 0 : i32
    %c0_i32_0 = arith.constant 0 : i32
    return %arg0, %c0_i32 : i32, i32
  }
  func.func @transform_1(%arg0: i32) -> (i32, i32) {
    %c0_i32 = arith.constant 0 : i32
    %c0_i32_0 = arith.constant 0 : i32
    %c0_i32_1 = arith.constant 0 : i32
    return %c0_i32, %c0_i32_0 : i32, i32
  }
  func.func @transform_2(%arg0: i32) -> (i32, i32) {
    %c0_i32 = arith.constant 0 : i32
    %c0_i32_0 = arith.constant 0 : i32
    %c0_i32_1 = arith.constant 0 : i32
    return %c0_i32, %c0_i32_0 : i32, i32
  }
  func.func @transform_3(%arg0: i32) -> (i32, i32) {
    %c0_i32 = arith.constant 0 : i32
    %c0_i32_0 = arith.constant 0 : i32
    return %arg0, %c0_i32 : i32, i32
  }
}

</mosaic_0001>

<llo_original>
// kernel: tpu_custom_call.1
$region0: #{tpu_custom_call.1}
  #allocation0 [shape = 'u32[]', space=smem, size = 0x4, offset = 0x4, fixed_abs, tag = 'smem constant byte address 0x4 - core index']
  #allocation1 [shape = 'u32[144,128]{1,0:T(1,128)}', space=vmem, size = 0x12000, scoped, tag = 'internal scratch']
  %s0 = inlined_call_operand.vmem [shape: f32[144,32], index: 0, kind: input, shape index: {}]
  %s1 = inlined_call_operand.vmem [shape: f32[32,128], index: 1, kind: input, shape index: {}]
  %s2 = inlined_call_operand.vmem [shape: f32[72,128], index: 2, kind: input, shape index: {}]
  %s3 = inlined_call_operand.hbm [shape: f32[144,128], index: 3, kind: output, shape index: {}]
  %s4 = sld [smem:[#allocation0]]
  $region22: #{tpu_custom_call.1} parent=0
    _
  %s6 = ssub.s32 1, %s4
  %s7 = scalar_select 0, %s6, %s4
  $region1: #{tpu_custom_call.1} parent=0
    #allocation2 [shape = 'u8[73728]{0}', space=vmem, size = 0x12000, scoped, tag = 'output window, operand 0, single buffered']
    #allocation3 [shape = 's32[1]{0}', space=sflag, size = 0x4, scoped, tag = 'scoped memory for tpu_custom_call.1']
    %8 = vsyncpa [#allocation3], 0
    // Predicated region
    $region2: #{tpu_custom_call.1} parent=1 // pred_check
      _
    $region3: #{tpu_custom_call.1} parent=1 // pred_check_branch
      %10 = sbr.rel (0) target = $region5
    $region4: #{tpu_custom_call.1} parent=1 // pred_region
      _
    $region5: #{tpu_custom_call.1} parent=1 // pred_fallthru
      _
    // Predicated region
    $region6: #{tpu_custom_call.1} parent=1 // pred_check
      _
    $region7: #{tpu_custom_call.1} parent=1 // pred_check_branch
      %12 = sbr.rel (0) target = $region9
    $region8: #{tpu_custom_call.1} parent=1 // pred_region
      _
    $region9: #{tpu_custom_call.1} parent=1 // pred_fallthru
      _
    // Predicated region
    $region10: #{tpu_custom_call.1} parent=1 // pred_check
      _
    $region11: #{tpu_custom_call.1} parent=1 // pred_check_branch
      %14 = sbr.rel (0) target = $region13
    $region12: #{tpu_custom_call.1} parent=1 // pred_region
      _
    $region13: #{tpu_custom_call.1} parent=1 // pred_fallthru
      _
    %v15 = vld [vmem:[%s0] sm:$0xff]
    %v16 = vld [vmem:[%s0 + $0x8] sm:$0xff]
    %v17 = vld [vmem:[%s0 + $0x10] sm:$0xff]
    %v18 = vld [vmem:[%s0 + $0x18] sm:$0xff]
    %v19 = vld [vmem:[%s0 + $0x20] sm:$0xff]
    %v20 = vld [vmem:[%s0 + $0x28] sm:$0xff]
    %v21 = vld [vmem:[%s0 + $0x30] sm:$0xff]
    %v22 = vld [vmem:[%s0 + $0x38] sm:$0xff]
    %v23 = vld [vmem:[%s0 + $0x40] sm:$0xff]
    %v24 = vld [vmem:[%s0 + $0x48] sm:$0xff]
    %v25 = vld [vmem:[%s0 + $0x50] sm:$0xff]
    %v26 = vld [vmem:[%s0 + $0x58] sm:$0xff]
    %v27 = vld [vmem:[%s0 + $0x60] sm:$0xff]
    %v28 = vld [vmem:[%s0 + $0x68] sm:$0xff]
    %v29 = vld [vmem:[%s0 + $0x70] sm:$0xff]
    %v30 = vld [vmem:[%s0 + $0x78] sm:$0xff]
    %v31 = vld [vmem:[%s0 + $0x80] sm:$0xff]
    %v32 = vld [vmem:[%s0 + $0x88] sm:$0xff]
    %v33 = vld [vmem:[%s1] sm:$0xff]
    %v34 = vld [vmem:[%s1 + $0x8] sm:$0xff]
    %v35 = vld [vmem:[%s1 + $0x10] sm:$0xff]
    %v36 = vld [vmem:[%s1 + $0x18] sm:$0xff]
    %vm37 = vcmask 261120
    %v39 = vsel %vm37, %v15, 0
    %v42 = vsel %vm37, %v16, 0
    %v45 = vsel %vm37, %v17, 0
    %v48 = vsel %vm37, %v18, 0
    %v51 = vsel %vm37, %v19, 0
    %v54 = vsel %vm37, %v20, 0
    %v57 = vsel %vm37, %v21, 0
    %v60 = vsel %vm37, %v22, 0
    %v63 = vsel %vm37, %v23, 0
    %v66 = vsel %vm37, %v24, 0
    %v69 = vsel %vm37, %v25, 0
    %v72 = vsel %vm37, %v26, 0
    %v75 = vsel %vm37, %v27, 0
    %v78 = vsel %vm37, %v28, 0
    %v81 = vsel %vm37, %v29, 0
    %v84 = vsel %vm37, %v30, 0
    %v87 = vsel %vm37, %v31, 0
    %v90 = vsel %vm37, %v32, 0
    %92 = vmatprep.subr.mxu0 0.0
    %93 = vmatpush1.msra.mxu0 %v33
    %94 = vmatprep.subr.mxu0 0.0
    %95 = vmatpush1.msra.mxu0 %v34
    %96 = vmatprep.subr.mxu0 0.0
    %97 = vmatpush1.msra.mxu0 %v35
    %98 = vmatprep.subr.mxu0 0.0
    %99 = vmatpush1.msra.mxu0 %v36
    %100 = vmatprep.subr.mxu0 0.0
    %101 = vmatpush1.msra.mxu0 0.0
    %102 = vmatprep.subr.mxu0 0.0
    %103 = vmatpush1.msra.mxu0 0.0
    %104 = vmatprep.subr.mxu0 0.0
    %105 = vmatpush1.msra.mxu0 0.0
    %106 = vmatprep.subr.mxu0 0.0
    %107 = vmatpush1.msra.mxu0 0.0
    %108 = vmatprep.subr.mxu0 0.0
    %109 = vmatpush1.msra.mxu0 0.0
    %110 = vmatprep.subr.mxu0 0.0
    %111 = vmatpush1.msra.mxu0 0.0
    %112 = vmatprep.subr.mxu0 0.0
    %113 = vmatpush1.msra.mxu0 0.0
    %114 = vmatprep.subr.mxu0 0.0
    %115 = vmatpush1.msra.mxu0 0.0
    %116 = vmatprep.subr.mxu0 0.0
    %117 = vmatpush1.msra.mxu0 0.0
    %118 = vmatprep.subr.mxu0 0.0
    %119 = vmatpush1.msra.mxu0 0.0
    %120 = vmatprep.subr.mxu0 0.0
    %121 = vmatpush1.msra.mxu0 0.0
    %122 = vmatprep.subr.mxu0 0.0
    %123 = vmatpush1.msra.mxu0 0.0
    %124 = vmatprep.subr.mxu0 0.0
    %125 = vmatpush1.msra.mxu0 0.0
    %126 = vmatprep.subr.mxu0 0.0
    %127 = vmatpush1.msra.mxu0 0.0
    %128 = vmatprep.subr.mxu0 0.0
    %129 = vmatpush1.msra.mxu0 0.0
    %130 = vmatprep.subr.mxu0 0.0
    %131 = vmatpush1.msra.mxu0 0.0
    %132 = vmatprep.subr.mxu0 0.0
    %133 = vmatpush1.msra.mxu0 0.0
    %134 = vmatprep.subr.mxu0 0.0
    %135 = vmatpush1.msra.mxu0 0.0
    %136 = vmatprep.subr.mxu0 0.0
    %137 = vmatpush1.msra.mxu0 0.0
    %138 = vmatprep.subr.mxu0 0.0
    %139 = vmatpush1.msra.mxu0 0.0
    %140 = vmatprep.subr.mxu0 0.0
    %141 = vmatpush1.msra.mxu0 0.0
    %142 = vmatprep.subr.mxu0 0.0
    %143 = vmatpush1.msra.mxu0 0.0
    %144 = vmatprep.subr.mxu0 0.0
    %145 = vmatpush1.msra.mxu0 0.0
    %146 = vmatprep.subr.mxu0 0.0
    %147 = vmatpush1.msra.mxu0 0.0
    %148 = vmatprep.subr.mxu0 0.0
    %149 = vmatpush1.msra.mxu0 0.0
    %150 = vmatprep.subr.mxu0 0.0
    %151 = vmatpush1.msra.mxu0 0.0
    %152 = vmatprep.subr.mxu0 0.0
    %153 = vmatpush1.msra.mxu0 0.0
    %154 = vmatprep.subr.mxu0 0.0
    %155 = vmatpush1.msra.mxu0 0.0
    %156 = vmatprep.mubr.f32.mxu0 0.0
    %157 = vmatmul.mubr.f32.gmra.mrb[0].mxu0 %v39
    %v158 = vpop.f32.mrb[0].mxu0
    %v159 = vadd.f32 0.0, %v158
    %v160 = vpop.f32.mrb[0].mxu0
    %161 = vmatprep.mubr.f32.mxu0 0.0
    %162 = vmatmul.mubr.f32.gmra.mrb[0].mxu0 %v42
    %v163 = vpop.f32.mrb[0].mxu0
    %v164 = vadd.f32 0.0, %v163
    %v165 = vpop.f32.mrb[0].mxu0
    %166 = vmatprep.mubr.f32.mxu0 0.0
    %167 = vmatmul.mubr.f32.gmra.mrb[0].mxu0 %v45
    %v168 = vpop.f32.mrb[0].mxu0
    %v169 = vadd.f32 0.0, %v168
    %v170 = vpop.f32.mrb[0].mxu0
    %171 = vmatprep.mubr.f32.mxu0 0.0
    %172 = vmatmul.mubr.f32.gmra.mrb[0].mxu0 %v48
    %v173 = vpop.f32.mrb[0].mxu0
    %v174 = vadd.f32 0.0, %v173
    %v175 = vpop.f32.mrb[0].mxu0
    %176 = vmatprep.mubr.f32.mxu0 0.0
    %177 = vmatmul.mubr.f32.gmra.mrb[0].mxu0 %v51
    %v178 = vpop.f32.mrb[0].mxu0
    %v179 = vadd.f32 0.0, %v178
    %v180 = vpop.f32.mrb[0].mxu0
    %181 = vmatprep.mubr.f32.mxu0 0.0
    %182 = vmatmul.mubr.f32.gmra.mrb[0].mxu0 %v54
    %v183 = vpop.f32.mrb[0].mxu0
    %v184 = vadd.f32 0.0, %v183
    %v185 = vpop.f32.mrb[0].mxu0
    %186 = vmatprep.mubr.f32.mxu0 0.0
    %187 = vmatmul.mubr.f32.gmra.mrb[0].mxu0 %v57
    %v188 = vpop.f32.mrb[0].mxu0
    %v189 = vadd.f32 0.0, %v188
    %v190 = vpop.f32.mrb[0].mxu0
    %191 = vmatprep.mubr.f32.mxu0 0.0
    %192 = vmatmul.mubr.f32.gmra.mrb[0].mxu0 %v60
    %v193 = vpop.f32.mrb[0].mxu0
    %v194 = vadd.f32 0.0, %v193
    %v195 = vpop.f32.mrb[0].mxu0
    %196 = vmatprep.mubr.f32.mxu0 0.0
    %197 = vmatmul.mubr.f32.gmra.mrb[0].mxu0 %v63
    %v198 = vpop.f32.mrb[0].mxu0
    %v199 = vadd.f32 0.0, %v198
    %v200 = vpop.f32.mrb[0].mxu0
    %201 = vmatprep.mubr.f32.mxu0 0.0
    %202 = vmatmul.mubr.f32.gmra.mrb[0].mxu0 %v66
    %v203 = vpop.f32.mrb[0].mxu0
    %v204 = vadd.f32 0.0, %v203
    %v205 = vpop.f32.mrb[0].mxu0
    %206 = vmatprep.mubr.f32.mxu0 0.0
    %207 = vmatmul.mubr.f32.gmra.mrb[0].mxu0 %v69
    %v208 = vpop.f32.mrb[0].mxu0
    %v209 = vadd.f32 0.0, %v208
    %v210 = vpop.f32.mrb[0].mxu0
    %211 = vmatprep.mubr.f32.mxu0 0.0
    %212 = vmatmul.mubr.f32.gmra.mrb[0].mxu0 %v72
    %v213 = vpop.f32.mrb[0].mxu0
    %v214 = vadd.f32 0.0, %v213
    %v215 = vpop.f32.mrb[0].mxu0
    %216 = vmatprep.mubr.f32.mxu0 0.0
    %217 = vmatmul.mubr.f32.gmra.mrb[0].mxu0 %v75
    %v218 = vpop.f32.mrb[0].mxu0
    %v219 = vadd.f32 0.0, %v218
    %v220 = vpop.f32.mrb[0].mxu0
    %221 = vmatprep.mubr.f32.mxu0 0.0
    %222 = vmatmul.mubr.f32.gmra.mrb[0].mxu0 %v78
    %v223 = vpop.f32.mrb[0].mxu0
    %v224 = vadd.f32 0.0, %v223
    %v225 = vpop.f32.mrb[0].mxu0
    %226 = vmatprep.mubr.f32.mxu0 0.0
    %227 = vmatmul.mubr.f32.gmra.mrb[0].mxu0 %v81
    %v228 = vpop.f32.mrb[0].mxu0
    %v229 = vadd.f32 0.0, %v228
    %v230 = vpop.f32.mrb[0].mxu0
    %231 = vmatprep.mubr.f32.mxu0 0.0
    %232 = vmatmul.mubr.f32.gmra.mrb[0].mxu0 %v84
    %v233 = vpop.f32.mrb[0].mxu0
    %v234 = vadd.f32 0.0, %v233
    %v235 = vpop.f32.mrb[0].mxu0
    %236 = vmatprep.mubr.f32.mxu0 0.0
    %237 = vmatmul.mubr.f32.gmra.mrb[0].mxu0 %v87
    %v238 = vpop.f32.mrb[0].mxu0
    %v239 = vadd.f32 0.0, %v238
    %v240 = vpop.f32.mrb[0].mxu0
    %241 = vmatprep.mubr.f32.mxu0 0.0
    %242 = vmatmul.mubr.f32.gmra.mrb[0].mxu0 %v90
    %v243 = vpop.f32.mrb[0].mxu0
    %v244 = vadd.f32 0.0, %v243
    %v245 = vpop.f32.mrb[0].mxu0
    %246 = vdwg.mxu0
    %v247 = vld [vmem:[%s2] sm:$0xff]
    %v248 = vld [vmem:[%s2 + $0x8] sm:$0xff]
    %v249 = vld [vmem:[%s2 + $0x10] sm:$0xff]
    %v250 = vld [vmem:[%s2 + $0x18] sm:$0xff]
    %v251 = vld [vmem:[%s2 + $0x20] sm:$0xff]
    %v252 = vld [vmem:[%s2 + $0x28] sm:$0xff]
    %v253 = vld [vmem:[%s2 + $0x30] sm:$0xff]
    %v254 = vld [vmem:[%s2 + $0x38] sm:$0xff]
    %v255 = vld [vmem:[%s2 + $0x40] sm:$0xff]
    %v256 = vadd.f32 %v159, %v247
    %v257 = vadd.f32 %v164, %v248
    %v258 = vadd.f32 %v169, %v249
    %v259 = vadd.f32 %v174, %v250
    %v260 = vadd.f32 %v179, %v251
    %v261 = vadd.f32 %v184, %v252
    %v262 = vadd.f32 %v189, %v253
    %v263 = vadd.f32 %v194, %v254
    %v264 = vadd.f32 %v199, %v255
    %v265 = vadd.f32 %v204, %v247
    %v266 = vadd.f32 %v209, %v248
    %v267 = vadd.f32 %v214, %v249
    %v268 = vadd.f32 %v219, %v250
    %v269 = vadd.f32 %v224, %v251
    %v270 = vadd.f32 %v229, %v252
    %v271 = vadd.f32 %v234, %v253
    %v272 = vadd.f32 %v239, %v254
    %v273 = vadd.f32 %v244, %v255
    %274 = vst [vmem:[#allocation2] sm:$0xff] %v256
    %275 = vst [vmem:[#allocation2 + $0x8] sm:$0xff] %v257
    %276 = vst [vmem:[#allocation2 + $0x10] sm:$0xff] %v258
    %277 = vst [vmem:[#allocation2 + $0x18] sm:$0xff] %v259
    %278 = vst [vmem:[#allocation2 + $0x20] sm:$0xff] %v260
    %279 = vst [vmem:[#allocation2 + $0x28] sm:$0xff] %v261
    %280 = vst [vmem:[#allocation2 + $0x30] sm:$0xff] %v262
    %281 = vst [vmem:[#allocation2 + $0x38] sm:$0xff] %v263
    %282 = vst [vmem:[#allocation2 + $0x40] sm:$0xff] %v264
    %283 = vst [vmem:[#allocation2 + $0x48] sm:$0xff] %v265
    %284 = vst [vmem:[#allocation2 + $0x50] sm:$0xff] %v266
    %285 = vst [vmem:[#allocation2 + $0x58] sm:$0xff] %v267
    %286 = vst [vmem:[#allocation2 + $0x60] sm:$0xff] %v268
    %287 = vst [vmem:[#allocation2 + $0x68] sm:$0xff] %v269
    %288 = vst [vmem:[#allocation2 + $0x70] sm:$0xff] %v270
    %289 = vst [vmem:[#allocation2 + $0x78] sm:$0xff] %v271
    %290 = vst [vmem:[#allocation2 + $0x80] sm:$0xff] %v272
    %291 = vst [vmem:[#allocation2 + $0x88] sm:$0xff] %v273
    // Predicated region
    $region14: #{tpu_custom_call.1} parent=1 // pred_check
      _
    $region15: #{tpu_custom_call.1} parent=1 // pred_check_branch
      %293 = sbr.rel (0) target = $region17
    $region16: #{tpu_custom_call.1} parent=1 // pred_region
      %s295 = ssub.s32 2304, 2304
      %296 = vsyncadd [#allocation3], %s295
      %s297 = sshll.u32 [#allocation2], 4
      %s298 = int_to_ptr.vmem [resolvable:$true] %s297
      %303 = dma.vmem_to_hbm [thread:$0]  %s298, 2304, %s3, [#allocation3], 128, 128, 8
    $region17: #{tpu_custom_call.1} parent=1 // pred_fallthru
      _
    // Predicated region
    $region18: #{tpu_custom_call.1} parent=1 // pred_check
      _
    $region19: #{tpu_custom_call.1} parent=1 // pred_check_branch
      %305 = sbr.rel (0) target = $region21
    $region20: #{tpu_custom_call.1} parent=1 // pred_region
      %306 = dma.done [#allocation3], 2304
    $region21: #{tpu_custom_call.1} parent=1 // pred_fallthru
      _
    %307 = vsyncpa [#allocation3], 1

</llo_original>
